<compile_context>
chip_gen: v6e
topology: v6e:2x2x1
jax: 0.10.0
libtpu: 0.0.40
codegen_flags: <defaults>
</compile_context>

<pallas_src>
import jax
import jax.numpy as jnp
from jax import lax
from jax.experimental import pallas as pl
from jax.experimental.pallas import tpu as pltpu


def _pick_tile_rows(rows, lane, itemsize, target_bytes):
    """Largest multiple-of-8 row count that divides `rows` and fits the target."""
    if rows % 8 != 0:
        return rows                      # full-extent block (small arrays)
    row_bytes = lane * itemsize
    cap = max(8, min(rows, (target_bytes // row_bytes) // 8 * 8))
    t = cap
    while t >= 8:
        if rows % t == 0:
            return t
        t -= 8
    return rows


def _make_kernel(*, use_bias, use_act, has_dropout, drop_threshold, inv_keep,
                 tile_rows, lane):
    def kernel(*refs):
        idx = 0
        if has_dropout:
            seed_ref = refs[idx]; idx += 1
        if use_bias:
            bias_ref = refs[idx]; idx += 1
        h_ref = refs[idx]; idx += 1
        idx += 1                              # aliased repr slab (HBM, unread)
        h_out_ref = refs[idx]; idx += 1
        repr_out_ref = refs[idx]

        x = h_ref[...]
        if use_bias:
            x = x + bias_ref[...]             # (1, lane) broadcasts over rows
        if use_act:
            x = jnp.maximum(x, jnp.zeros((), x.dtype))
        if has_dropout:
            # Counter-based hash RNG (lowbias32) on the *global* element index
            # so the mask is independent of the tiling, plus a runtime seed.
            r0 = pl.program_id(0) * tile_rows
            row = lax.broadcasted_iota(jnp.int32, (tile_rows, lane), 0) + r0
            col = lax.broadcasted_iota(jnp.int32, (tile_rows, lane), 1)
            k = (row * lane + col).astype(jnp.uint32)
            k = k + seed_ref[...].astype(jnp.uint32) * jnp.uint32(2654435761)
            k = k ^ (k >> 16)
            k = k * jnp.uint32(0x7FEB352D)
            k = k ^ (k >> 15)
            k = k * jnp.uint32(0x846CA68B)
            k = k ^ (k >> 16)
            keep = k >= jnp.uint32(drop_threshold)   # P(drop) = threshold / 2^32
            x = jnp.where(keep, x * jnp.asarray(inv_keep, dtype=x.dtype),
                          jnp.zeros((), x.dtype))
        h_out_ref[...] = x
        repr_out_ref[...] = x[None, :, :]
    return kernel


def rgcn_layer_forward(h, bias=None, repr_slab=None, *, layer_slot=0,
                       activation=True, dropout=0.0, seed=0,
                       target_block_bytes=2 << 20):
    """Pallas implementation of RGCNLayer.forward (post-propagate part).

    h:         [N, D] aggregated node features (output of propagate()).
    bias:      [D] or None.
    repr_slab: [S, N, D] layer-major representation history (== torch
               `repr`.transpose(0,1)); slot `layer_slot` is overwritten with
               the new h in-place via input/output aliasing.  If None, a fresh
               (layer_slot+1)-slot slab is allocated (is_input_layer case).
    Returns (h_new [N, D], repr_slab_new [S, N, D]).
    """
    N, D = h.shape
    if repr_slab is None:
        repr_slab = jnp.zeros((layer_slot + 1, N, D), h.dtype)
    S = repr_slab.shape[0]
    assert repr_slab.shape == (S, N, D) and repr_slab.dtype == h.dtype
    assert 0 <= layer_slot < S
    assert 0.0 <= dropout < 1.0

    # Lane-dense folding: pack rows into the lane axis when D < 128.
    if D % 128 == 0:
        fold = 1
    elif 128 % D == 0 and N % (128 // D) == 0:
        fold = 128 // D
    else:
        fold = 1
    rows, lane = N // fold, fold * D

    h2 = h.reshape(rows, lane)
    slab2 = repr_slab.reshape(S, rows, lane)

    use_bias = bias is not None
    use_act = bool(activation)
    has_dropout = dropout > 0.0
    drop_threshold = min(int(round(dropout * 4294967296.0)), 4294967295)
    inv_keep = 1.0 / (1.0 - dropout) if has_dropout else 1.0

    tile_rows = _pick_tile_rows(rows, lane, h.dtype.itemsize, target_block_bytes)
    grid = (rows // tile_rows,)

    kernel = _make_kernel(
        use_bias=use_bias, use_act=use_act, has_dropout=has_dropout,
        drop_threshold=drop_threshold, inv_keep=inv_keep,
        tile_rows=tile_rows, lane=lane)

    in_specs, args = [], []
    if has_dropout:
        # Runtime seed (no recompile per step); fold in the layer slot so
        # layers sharing a step-seed get decorrelated masks.
        seed_arr = (jnp.asarray(seed, jnp.int32)
                    + jnp.int32(layer_slot * 1000003)).reshape(1, 1)
        in_specs.append(pl.BlockSpec((1, 1), lambda i: (0, 0)))
        args.append(seed_arr)
    if use_bias:
        b = bias.astype(h.dtype)
        b2 = (jnp.tile(b, fold) if fold > 1 else b).reshape(1, lane)
        in_specs.append(pl.BlockSpec((1, lane), lambda i: (0, 0)))
        args.append(b2)
    in_specs.append(pl.BlockSpec((tile_rows, lane), lambda i: (i, 0)))
    args.append(h2)
    # History slab: stays in HBM (never DMA'd in); aliased to output 1 so the
    # untouched slots are preserved without a concat/copy.
    in_specs.append(pl.BlockSpec(memory_space=pl.ANY))
    args.append(slab2)
    repr_in_index = len(args) - 1

    slot = int(layer_slot)
    out_specs = [
        pl.BlockSpec((tile_rows, lane), lambda i: (i, 0)),
        pl.BlockSpec((1, tile_rows, lane), lambda i: (slot, i, 0)),
    ]
    out_shape = [
        jax.ShapeDtypeStruct((rows, lane), h.dtype),
        jax.ShapeDtypeStruct((S, rows, lane), h.dtype),
    ]

    h_new2, slab_new2 = pl.pallas_call(
        kernel,
        grid=grid,
        in_specs=in_specs,
        out_specs=out_specs,
        out_shape=out_shape,
        input_output_aliases={repr_in_index: 1},
        compiler_params=pltpu.CompilerParams(
            dimension_semantics=("parallel",),
            vmem_limit_bytes=32 * 1024 * 1024,
        ),
    )(*args)

    return h_new2.reshape(N, D), slab_new2.reshape(S, N, D)


if __name__ == "__main__":
    key = jax.random.PRNGKey(0)
    k_h, k_b, k_r = jax.random.split(key, 3)

    N, D, L = 64, 32, 2          # nodes, out_dim, previously filled repr slots

    # Stand-in for propagate()'s aggregated node features.
    h = jax.random.normal(k_h, (N, D), dtype=jnp.float32)
    limit = (2.0 ** 0.5) * (6.0 / (1.0 + D)) ** 0.5     # xavier-uniform (relu gain)
    bias = jax.random.uniform(k_b, (D,), jnp.float32, minval=-limit, maxval=limit)
    # Layer-major history [L, N, D] (== torch repr.transpose(0,1)).
    repr_prev = jax.random.normal(k_r, (L, N, D), dtype=jnp.float32)

    # Preallocated slab with one empty slot for this layer.  In a full RGCN
    # stack this slab is allocated once for all layers, so no per-layer concat.
    slab = jnp.concatenate([repr_prev, jnp.zeros((1, N, D), jnp.float32)], axis=0)

    # 1) Eval mode (dropout off) -> exact match vs pure-JAX reference.
    h_new, slab_out = rgcn_layer_forward(
        h, bias, slab, layer_slot=L, activation=True, dropout=0.0, seed=0)
    jax.block_until_ready((h_new, slab_out))

    ref = jnp.maximum(h + bias[None, :], 0.0)
    assert h_new.shape == (N, D)
    assert slab_out.shape == (L + 1, N, D)
    assert jnp.allclose(h_new, ref, atol=1e-5, rtol=1e-5)
    assert jnp.allclose(slab_out[L], ref, atol=1e-5, rtol=1e-5)
    assert jnp.allclose(slab_out[:L], repr_prev)   # history preserved in place

    # 2) Training mode with dropout (input-layer path, fresh 1-slot slab).
    h_do, slab_do = rgcn_layer_forward(
        h, bias, None, layer_slot=0, activation=True, dropout=0.5, seed=1234)
    jax.block_until_ready((h_do, slab_do))
    assert h_do.shape == (N, D) and slab_do.shape == (1, N, D)

    pos = ref > 0.0
    kept = (h_do != 0.0) & pos
    frac = float(kept.sum()) / float(pos.sum())
    assert 0.35 < frac < 0.65, f"dropout keep fraction {frac} off"
    # Surviving entries equal the 1/(1-p)-scaled reference.
    assert jnp.allclose(jnp.where(kept, h_do, 0.0),
                        jnp.where(kept, 2.0 * ref, 0.0), atol=1e-5, rtol=1e-5)
    assert jnp.allclose(slab_do[0], h_do, atol=1e-5, rtol=1e-5)

    # Different runtime seed -> different mask, same compiled kernel.
    h_do2, _ = rgcn_layer_forward(
        h, bias, None, layer_slot=0, activation=True, dropout=0.5, seed=999)
    jax.block_until_ready(h_do2)
    assert bool(jnp.any(h_do != h_do2))

    print("KERNEL_OK")
</pallas_src>

<mosaic_0001>
module attributes {stable_mosaic.version = 11 : i64} {
  func.func @kernel(%arg0: i32, %arg1: memref<1x128xf32, #tpu.memory_space<vmem>>, %arg2: memref<16x128xf32, #tpu.memory_space<vmem>>, %arg3: memref<3x16x128xf32, #tpu.memory_space<any>>, %arg4: memref<16x128xf32, #tpu.memory_space<vmem>>, %arg5: memref<1x16x128xf32, #tpu.memory_space<vmem>>) attributes {dimension_semantics = [#tpu.dimension_semantics<parallel>], iteration_bounds = array<i64: 1>, scalar_prefetch = 0 : i64, scratch_operands = 0 : i64, tpu.core_type = #tpu.core_type<tc>, window_params = [{pipeline_mode = #tpu.pipeline_mode<synchronous>, transform_indices = @transform_0, window_bounds = array<i64: 1, 128>}, {transform_indices = @transform_1, window_bounds = array<i64: 16, 128>}, {}, {transform_indices = @transform_3, window_bounds = array<i64: 16, 128>}, {transform_indices = @transform_4, window_bounds = array<i64: 1, 16, 128>}]} {
    %c0 = arith.constant 0 : index
    %c0_0 = arith.constant 0 : index
    %0 = vector.load %arg2[%c0, %c0_0] : memref<16x128xf32, #tpu.memory_space<vmem>>, vector<16x128xf32>
    %c0_1 = arith.constant 0 : index
    %c0_2 = arith.constant 0 : index
    %1 = vector.load %arg1[%c0_1, %c0_2] : memref<1x128xf32, #tpu.memory_space<vmem>>, vector<1x128xf32>
    %2 = vector.broadcast %1 : vector<1x128xf32> to vector<16x128xf32>
    %3 = arith.addf %0, %2 : vector<16x128xf32>
    %cst = arith.constant 0.000000e+00 : f32
    %4 = vector.broadcast %cst : f32 to vector<16x128xf32>
    %5 = arith.maximumf %3, %4 : vector<16x128xf32>
    %c0_3 = arith.constant 0 : index
    %c0_4 = arith.constant 0 : index
    %6 = vector.load %arg4[%c0_3, %c0_4] : memref<16x128xf32, #tpu.memory_space<vmem>>, vector<16x128xf32>
    tpu.vector_store %arg4[%c0_3, %c0_4], %5 {strides = array<i32>} : memref<16x128xf32, #tpu.memory_space<vmem>>, vector<16x128xf32>,
    %7 = vector.shape_cast %5 : vector<16x128xf32> to vector<1x16x128xf32>
    %c0_5 = arith.constant 0 : index
    %c0_6 = arith.constant 0 : index
    %c0_7 = arith.constant 0 : index
    %8 = vector.load %arg5[%c0_5, %c0_6, %c0_7] : memref<1x16x128xf32, #tpu.memory_space<vmem>>, vector<1x16x128xf32>
    tpu.vector_store %arg5[%c0_5, %c0_6, %c0_7], %7 {strides = array<i32>} : memref<1x16x128xf32, #tpu.memory_space<vmem>>, vector<1x16x128xf32>,
    return
  }
  func.func @transform_0(%arg0: i32) -> (i32, i32) {
    %c0_i32 = arith.constant 0 : i32
    %c0_i32_0 = arith.constant 0 : i32
    %c0_i32_1 = arith.constant 0 : i32
    return %c0_i32, %c0_i32_0 : i32, i32
  }
  func.func @transform_1(%arg0: i32) -> (i32, i32) {
    %c0_i32 = arith.constant 0 : i32
    %c0_i32_0 = arith.constant 0 : i32
    return %arg0, %c0_i32 : i32, i32
  }
  func.func @transform_3(%arg0: i32) -> (i32, i32) {
    %c0_i32 = arith.constant 0 : i32
    %c0_i32_0 = arith.constant 0 : i32
    return %arg0, %c0_i32 : i32, i32
  }
  func.func @transform_4(%arg0: i32) -> (i32, i32, i32) {
    %c2_i32 = arith.constant 2 : i32
    %c0_i32 = arith.constant 0 : i32
    %c0_i32_0 = arith.constant 0 : i32
    return %c2_i32, %arg0, %c0_i32 : i32, i32, i32
  }
}

</mosaic_0001>

<llo_original>
// kernel: tpu_custom_call.1
$region0: #{tpu_custom_call.1}
  #allocation0 [shape = 'u32[]', space=smem, size = 0x4, offset = 0x4, fixed_abs, tag = 'smem constant byte address 0x4 - core index']
  #allocation1 [shape = 'u32[144,128]{1,0:T(1,128)}', space=vmem, size = 0x12000, scoped, tag = 'internal scratch']
  %s0 = inlined_call_operand.vmem [shape: f32[1,128], index: 0, kind: input, shape index: {}]
  %s1 = inlined_call_operand.vmem [shape: f32[16,128], index: 1, kind: input, shape index: {}]
  %s2 = inlined_call_operand.hbm [shape: f32[3,16,128], index: 2, kind: input, shape index: {}, may-alias: {2,4}]
  %s3 = inlined_call_operand.hbm [shape: f32[16,128], index: 3, kind: output, shape index: {0}]
  %s4 = inlined_call_operand.hbm [shape: f32[3,16,128], index: 4, kind: output, shape index: {1}, may-alias: {2,4}]
  %5 = xla_tuple %s3, %s4
  %s6 = sld [smem:[#allocation0]]
  $region26: #{tpu_custom_call.1} parent=0
    _
  %s8 = ssub.s32 1, %s6
  %s9 = scalar_select 0, %s8, %s6
  $region1: #{tpu_custom_call.1} parent=0
    #allocation2 [shape = 'u8[8192]{0}', space=vmem, size = 0x2000, scoped, tag = 'output window, operand 0, single buffered']
    #allocation3 [shape = 's32[1]{0}', space=sflag, size = 0x4, scoped, tag = 'scoped memory for tpu_custom_call.1']
    #allocation4 [shape = 'u8[8192]{0}', space=vmem, size = 0x2000, scoped, tag = 'output window, operand 1, single buffered']
    #allocation5 [shape = 's32[1]{0}', space=sflag, size = 0x4, scoped, tag = 'scoped memory for tpu_custom_call.1']
    %10 = vsyncpa [#allocation3], 0
    %11 = vsyncpa [#allocation5], 0
    // Predicated region
    $region2: #{tpu_custom_call.1} parent=1 // pred_check
      _
    $region3: #{tpu_custom_call.1} parent=1 // pred_check_branch
      %13 = sbr.rel (0) target = $region5
    $region4: #{tpu_custom_call.1} parent=1 // pred_region
      _
    $region5: #{tpu_custom_call.1} parent=1 // pred_fallthru
      _
    // Predicated region
    $region6: #{tpu_custom_call.1} parent=1 // pred_check
      _
    $region7: #{tpu_custom_call.1} parent=1 // pred_check_branch
      %15 = sbr.rel (0) target = $region9
    $region8: #{tpu_custom_call.1} parent=1 // pred_region
      _
    $region9: #{tpu_custom_call.1} parent=1 // pred_fallthru
      _
    %v16 = vld [vmem:[%s1] sm:$0xff]
    %v17 = vld [vmem:[%s1 + $0x8] sm:$0xff]
    %v18 = vld [vmem:[%s0] sm:$0x1]
    %v20 = vlaneseq
    %v21 = vshrl.u32 %v20, 7
    %v22 = vsub.s32 0, %v21
    %v23 = vrot.slane %v18, %v22
    %v25 = vadd.f32 %v16, %v23
    %v26 = vadd.f32 %v17, %v23
    %v27 = vmax.f32 %v25, 0.0
    %v28 = vmax.f32 %v26, 0.0
    %29 = vst [vmem:[#allocation2] sm:$0xff] %v27
    %30 = vst [vmem:[#allocation2 + $0x8] sm:$0xff] %v28
    %31 = vst [vmem:[#allocation4] sm:$0xff] %v27
    %32 = vst [vmem:[#allocation4 + $0x8] sm:$0xff] %v28
    // Predicated region
    $region10: #{tpu_custom_call.1} parent=1 // pred_check
      _
    $region11: #{tpu_custom_call.1} parent=1 // pred_check_branch
      %34 = sbr.rel (0) target = $region13
    $region12: #{tpu_custom_call.1} parent=1 // pred_region
      %s36 = ssub.s32 256, 256
      %37 = vsyncadd [#allocation3], %s36
      %s38 = sshll.u32 [#allocation2], 4
      %s39 = int_to_ptr.vmem [resolvable:$true] %s38
      %44 = dma.vmem_to_hbm [thread:$0]  %s39, 256, %s3, [#allocation3], 128, 128, 8
    $region13: #{tpu_custom_call.1} parent=1 // pred_fallthru
      _
    // Predicated region
    $region14: #{tpu_custom_call.1} parent=1 // pred_check
      _
    $region15: #{tpu_custom_call.1} parent=1 // pred_check_branch
      %46 = sbr.rel (0) target = $region17
    $region16: #{tpu_custom_call.1} parent=1 // pred_region
      %s48 = ssub.s32 256, 256
      %49 = vsyncadd [#allocation5], %s48
      %s50 = scalar_lea.hbm %s4, 512
      %s51 = sshll.u32 [#allocation4], 4
      %s52 = int_to_ptr.vmem [resolvable:$true] %s51
      %57 = dma.vmem_to_hbm [thread:$0]  %s52, 256, %s50, [#allocation5], 128, 128, 8
    $region17: #{tpu_custom_call.1} parent=1 // pred_fallthru
      _
    // Predicated region
    $region18: #{tpu_custom_call.1} parent=1 // pred_check
      _
    $region19: #{tpu_custom_call.1} parent=1 // pred_check_branch
      %59 = sbr.rel (0) target = $region21
    $region20: #{tpu_custom_call.1} parent=1 // pred_region
      %60 = dma.done [#allocation3], 256
    $region21: #{tpu_custom_call.1} parent=1 // pred_fallthru
      _
    // Predicated region
    $region22: #{tpu_custom_call.1} parent=1 // pred_check
      _
    $region23: #{tpu_custom_call.1} parent=1 // pred_check_branch
      %62 = sbr.rel (0) target = $region25
    $region24: #{tpu_custom_call.1} parent=1 // pred_region
      %63 = dma.done [#allocation5], 256
    $region25: #{tpu_custom_call.1} parent=1 // pred_fallthru
      _
    %64 = vsyncpa [#allocation3], 1
    %65 = vsyncpa [#allocation5], 1

</llo_original>
